<compile_context>
chip_gen: v7x
topology: tpu7x:2x2x1
jax: 0.10.0
libtpu: 0.0.40
codegen_flags: <defaults>
</compile_context>

<pallas_src>
import jax
import jax.numpy as jnp
from jax.experimental import pallas as pl
from jax.experimental.pallas import tpu as pltpu


def _gic_loss_kernel(g_ref, mask_ref, o_ref):
    """One grid step over Bt full (H, W) planes of both channels.

    g_ref   : (2, R, W) with R = Bt*H rows; channel 0 = Gx rows, 1 = Gy rows.
    mask_ref: (R, W) f32 interior mask (zero on every plane's border rows/cols).
    o_ref   : (1, 1, 1) f32 per-step partial sum.
    """
    R, W = mask_ref.shape
    f32 = jnp.float32

    gx = g_ref[0].astype(f32)                      # single load per channel
    gy = g_ref[1].astype(f32)

    # Horizontal (j +/- 1) neighbours of Gx via lane-axis XLU rolls.  The
    # wrapped-around columns only land on masked border columns.
    gx_left = pltpu.roll(gx, shift=1, axis=1)      # Gx[i, j-1]
    gx_right = pltpu.roll(gx, shift=W - 1, axis=1) # Gx[i, j+1]
    tx = jnp.abs(jnp.abs(gx_left - gx) - jnp.abs(gx_right - gx))

    # Vertical (i +/- 1) neighbours of Gy via sublane-axis XLU rolls over the
    # flattened (Bt*H, W) rows.  Rows that wrap across a plane (or batch)
    # boundary only land on masked border rows.
    gy_up = pltpu.roll(gy, shift=1, axis=0)        # Gy[i-1, j]
    gy_down = pltpu.roll(gy, shift=R - 1, axis=0)  # Gy[i+1, j]
    ty = jnp.abs(jnp.abs(gy_up - gy) - jnp.abs(gy_down - gy))

    o_ref[...] = jnp.sum((tx + ty) * mask_ref[...]).reshape(1, 1, 1)


def _pick_batch_tile(B, H, W, itemsize):
    """Largest divisor of B whose block fits a conservative VMEM budget."""
    # Per batch element: double-buffered (2, H, W) input block + f32 mask rows.
    per_b = 2 * H * W * itemsize * 2 + H * W * 4 * 2
    budget = 8 * 1024 * 1024  # conservative: fits v5e's 16 MiB scoped default
    bt_max = max(1, min(B, budget // max(per_b, 1)))
    for bt in range(bt_max, 0, -1):
        # Keep the block's sublane extent (bt*H) a multiple of 8 so the
        # blocked row axis stays tile-aligned.
        if B % bt == 0 and (bt * H) % 8 == 0:
            return bt
    # Fallback: a full-extent row block is always a legal layout.
    # TODO(synk): for planes too large to fit whole in scoped VMEM, add a
    # row-tile grid axis with a 2-row halo instead of full-plane blocks.
    return B


def gic_loss(grid):
    """GicLoss forward.  grid: (B, fine_height, fine_width, 2) -> scalar f32."""
    B, H, W, C = grid.shape
    if C != 2:
        raise ValueError("last dim of grid must be 2 (x, y)")
    if H < 3 or W < 3:
        raise ValueError("fine_height and fine_width must be >= 3")

    bt = _pick_batch_tile(B, H, W, grid.dtype.itemsize)
    nsteps = B // bt
    R = bt * H

    # Single deinterleave pass: (B, H, W, 2) -> (2, B, H, W) -> (2, B*H, W).
    # The reshape is a free contiguous collapse; no per-channel transpose.
    g2 = jnp.moveaxis(grid, -1, 0).reshape(2, B * H, W)

    # Interior mask: 1 inside the (1..H-2, 1..W-2) window of every plane,
    # 0 on the borders (this also kills the rolled-in wrap rows/columns).
    rows = (jnp.arange(H) >= 1) & (jnp.arange(H) <= H - 2)
    cols = (jnp.arange(W) >= 1) & (jnp.arange(W) <= W - 2)
    mask = (rows[:, None] & cols[None, :]).astype(jnp.float32)  # (H, W)
    mask = jnp.tile(mask, (bt, 1))                              # (R, W)

    partials = pl.pallas_call(
        _gic_loss_kernel,
        out_shape=jax.ShapeDtypeStruct((nsteps, 1, 1), jnp.float32),
        grid_spec=pltpu.PrefetchScalarGridSpec(
            num_scalar_prefetch=0,
            grid=(nsteps,),
            in_specs=[
                # Bt planes of both channels per step.
                pl.BlockSpec((2, R, W), lambda b: (0, b, 0)),
                # Mask: constant block index -> fetched once, stays resident.
                pl.BlockSpec((R, W), lambda b: (0, 0)),
            ],
            out_specs=pl.BlockSpec((1, 1, 1), lambda b: (b, 0, 0)),
        ),
        compiler_params=pltpu.CompilerParams(
            # Independent per-step partials -> batch axis can be sharded
            # across TensorCores (2x on v7x, neutral on v5e/v6e).
            dimension_semantics=("parallel",),
        ),
    )(g2, mask)
    return jnp.sum(partials)


def _gic_loss_ref(grid):
    """Pure-JAX reference mirroring the PyTorch module exactly."""
    _, H, W, _ = grid.shape
    gx = grid[..., 0]
    gy = grid[..., 1]
    gxc = gx[:, 1:H - 1, 1:W - 1]
    gxl = gx[:, 1:H - 1, 0:W - 2]
    gxr = gx[:, 1:H - 1, 2:W]
    gyc = gy[:, 1:H - 1, 1:W - 1]
    gyu = gy[:, 0:H - 2, 1:W - 1]
    gyd = gy[:, 2:H, 1:W - 1]
    dtleft = jnp.abs(gxl - gxc)
    dtright = jnp.abs(gxr - gxc)
    dtup = jnp.abs(gyu - gyc)
    dtdown = jnp.abs(gyd - gyc)
    return jnp.sum(jnp.abs(dtleft - dtright) + jnp.abs(dtup - dtdown))


if __name__ == "__main__":
    key = jax.random.PRNGKey(0)
    B, fine_height, fine_width = 2, 16, 16
    grid_in = jax.random.normal(key, (B, fine_height, fine_width, 2),
                                dtype=jnp.float32)

    loss = jax.jit(gic_loss)(grid_in)
    loss = jax.block_until_ready(loss)

    ref = _gic_loss_ref(grid_in)
    assert loss.shape == ()
    assert jnp.allclose(loss, ref, rtol=1e-5, atol=1e-4), (float(loss), float(ref))

    print("KERNEL_OK")
</pallas_src>

<mosaic_0001>
module attributes {stable_mosaic.version = 11 : i64} {
  func.func @_gic_loss_kernel(%arg0: i32, %arg1: memref<2x32x16xf32, #tpu.memory_space<vmem>>, %arg2: memref<32x16xf32, #tpu.memory_space<vmem>>, %arg3: memref<1x1x1xf32, #tpu.memory_space<vmem>>) attributes {dimension_semantics = [#tpu.dimension_semantics<parallel>], iteration_bounds = array<i64: 1>, scalar_prefetch = 0 : i64, scratch_operands = 0 : i64, tpu.core_type = #tpu.core_type<tc>, window_params = [{transform_indices = @transform_0, window_bounds = array<i64: 2, 32, 16>}, {pipeline_mode = #tpu.pipeline_mode<synchronous>, transform_indices = @transform_1, window_bounds = array<i64: 32, 16>}, {transform_indices = @transform_2, window_bounds = array<i64: 1, 1, 1>}]} {
    %c0 = arith.constant 0 : index
    %c0_0 = arith.constant 0 : index
    %c0_1 = arith.constant 0 : index
    %0 = vector.load %arg1[%c0, %c0_0, %c0_1] : memref<2x32x16xf32, #tpu.memory_space<vmem>>, vector<1x32x16xf32>
    %1 = vector.shape_cast %0 : vector<1x32x16xf32> to vector<32x16xf32>
    %c1 = arith.constant 1 : index
    %c0_2 = arith.constant 0 : index
    %c0_3 = arith.constant 0 : index
    %2 = vector.load %arg1[%c1, %c0_2, %c0_3] : memref<2x32x16xf32, #tpu.memory_space<vmem>>, vector<1x32x16xf32>
    %3 = vector.shape_cast %2 : vector<1x32x16xf32> to vector<32x16xf32>
    %c1_i32 = arith.constant 1 : i32
    %4 = tpu.dynamic_rotate %1 by %c1_i32 dim 1 : vector<32x16xf32>, i32 -> vector<32x16xf32>
    %c15_i32 = arith.constant 15 : i32
    %5 = tpu.dynamic_rotate %1 by %c15_i32 dim 1 : vector<32x16xf32>, i32 -> vector<32x16xf32>
    %6 = arith.subf %4, %1 : vector<32x16xf32>
    %7 = math.absf %6 : vector<32x16xf32>
    %8 = arith.subf %5, %1 : vector<32x16xf32>
    %9 = math.absf %8 : vector<32x16xf32>
    %10 = arith.subf %7, %9 : vector<32x16xf32>
    %11 = math.absf %10 : vector<32x16xf32>
    %c1_i32_4 = arith.constant 1 : i32
    %12 = tpu.dynamic_rotate %3 by %c1_i32_4 dim 0 : vector<32x16xf32>, i32 -> vector<32x16xf32>
    %c31_i32 = arith.constant 31 : i32
    %13 = tpu.dynamic_rotate %3 by %c31_i32 dim 0 : vector<32x16xf32>, i32 -> vector<32x16xf32>
    %14 = arith.subf %12, %3 : vector<32x16xf32>
    %15 = math.absf %14 : vector<32x16xf32>
    %16 = arith.subf %13, %3 : vector<32x16xf32>
    %17 = math.absf %16 : vector<32x16xf32>
    %18 = arith.subf %15, %17 : vector<32x16xf32>
    %19 = math.absf %18 : vector<32x16xf32>
    %20 = arith.addf %11, %19 : vector<32x16xf32>
    %c0_5 = arith.constant 0 : index
    %c0_6 = arith.constant 0 : index
    %21 = vector.load %arg2[%c0_5, %c0_6] : memref<32x16xf32, #tpu.memory_space<vmem>>, vector<32x16xf32>
    %22 = arith.mulf %20, %21 : vector<32x16xf32>
    %23 = vector.shape_cast %22 : vector<32x16xf32> to vector<1x32x16xf32>
    %cst = arith.constant dense<0.000000e+00> : vector<1xf32>
    %24 = vector.multi_reduction <add>, %23, %cst [1, 2] : vector<1x32x16xf32> to vector<1xf32>
    %25 = vector.shape_cast %24 : vector<1xf32> to vector<1x1x1xf32>
    %26 = vector.extract %25[0, 0, 0] : f32 from vector<1x1x1xf32>
    %27 = vector.broadcast %26 : f32 to vector<1x1x1xf32>
    %c0_7 = arith.constant 0 : index
    %c0_8 = arith.constant 0 : index
    %c0_9 = arith.constant 0 : index
    %28 = vector.load %arg3[%c0_7, %c0_8, %c0_9] : memref<1x1x1xf32, #tpu.memory_space<vmem>>, vector<1x1x1xf32>
    tpu.vector_store %arg3[%c0_7, %c0_8, %c0_9], %27 {strides = array<i32>} : memref<1x1x1xf32, #tpu.memory_space<vmem>>, vector<1x1x1xf32>,
    return
  }
  func.func @transform_0(%arg0: i32) -> (i32, i32, i32) {
    %c0_i32 = arith.constant 0 : i32
    %c0_i32_0 = arith.constant 0 : i32
    %c0_i32_1 = arith.constant 0 : i32
    return %c0_i32, %arg0, %c0_i32_0 : i32, i32, i32
  }
  func.func @transform_1(%arg0: i32) -> (i32, i32) {
    %c0_i32 = arith.constant 0 : i32
    %c0_i32_0 = arith.constant 0 : i32
    %c0_i32_1 = arith.constant 0 : i32
    return %c0_i32, %c0_i32_0 : i32, i32
  }
  func.func @transform_2(%arg0: i32) -> (i32, i32, i32) {
    %c0_i32 = arith.constant 0 : i32
    %c0_i32_0 = arith.constant 0 : i32
    %c0_i32_1 = arith.constant 0 : i32
    return %arg0, %c0_i32, %c0_i32_0 : i32, i32, i32
  }
}

</mosaic_0001>

<llo_original>
// kernel: gic_loss.1
$region0: #{gic_loss.1}
  #allocation0 [shape = 'u32[]', space=smem, size = 0x4, offset = 0x4, fixed_abs, tag = 'smem constant byte address 0x4 - core index']
  #allocation1 [shape = 'u32[144,128]{1,0:T(1,128)}', space=vmem, size = 0x12000, scoped, tag = 'internal scratch']
  %s0 = inlined_call_operand.vmem [shape: f32[2,32,16], index: 0, kind: input, shape index: {}]
  %s1 = inlined_call_operand.vmem [shape: f32[32,16], index: 1, kind: input, shape index: {}]
  %s2 = inlined_call_operand.hbm [shape: f32[1,1,1], index: 2, kind: output, shape index: {}]
  %s3 = sld [smem:[#allocation0]]
  $region18: #{gic_loss.1} parent=0
    _
  %s5 = ssub.s32 1, %s3
  %s6 = scalar_select 0, %s5, %s3
  $region1: #{gic_loss.1} parent=0
    #allocation2 [shape = 'u8[512]{0}', space=vmem, size = 0x400, scoped, tag = 'output window, operand 0, single buffered']
    #allocation3 [shape = 's32[1]{0}', space=sflag, size = 0x4, scoped, tag = 'scoped memory for gic_loss.1']
    %7 = vsyncpa [#allocation3], 0
    // Predicated region
    $region2: #{gic_loss.1} parent=1 // pred_check
      _
    $region3: #{gic_loss.1} parent=1 // pred_check_branch
      %9 = sbr.rel (0) target = $region5
    $region4: #{gic_loss.1} parent=1 // pred_region
      _
    $region5: #{gic_loss.1} parent=1 // pred_fallthru
      _
    // Predicated region
    $region6: #{gic_loss.1} parent=1 // pred_check
      _
    $region7: #{gic_loss.1} parent=1 // pred_check_branch
      %11 = sbr.rel (0) target = $region9
    $region8: #{gic_loss.1} parent=1 // pred_region
      _
    $region9: #{gic_loss.1} parent=1 // pred_fallthru
      _
    %v12 = vld [vmem:[%s0] sm:$0xff]
    %v13 = vld [vmem:[%s0 + $0x8] sm:$0xff]
    %v14 = vld [vmem:[%s0 + $0x10] sm:$0xff]
    %v15 = vld [vmem:[%s0 + $0x18] sm:$0xff]
    %s16 = scalar_lea.vmem %s0, 32
    %v17 = vld [vmem:[%s16] sm:$0xff]
    %v18 = vld [vmem:[%s16 + $0x8] sm:$0xff]
    %v19 = vld [vmem:[%s16 + $0x10] sm:$0xff]
    %v20 = vld [vmem:[%s16 + $0x18] sm:$0xff]
    %vm21 = vcmask 1047680
    %22 = vrot.lane.b32.xlu0 %v12, 16
    %v23 = vpop.permute.xlu0 %22
    %v24 = vsel %vm21, %v23, %v12
    %25 = vrot.lane.b32.xlu0 %v13, 16
    %v26 = vpop.permute.xlu0 %25
    %v27 = vsel %vm21, %v26, %v13
    %28 = vrot.lane.b32.xlu0 %v14, 16
    %v29 = vpop.permute.xlu0 %28
    %v30 = vsel %vm21, %v29, %v14
    %31 = vrot.lane.b32.xlu0 %v15, 16
    %v32 = vpop.permute.xlu0 %31
    %v33 = vsel %vm21, %v32, %v15
    %34 = vrot.lane.b32.xlu0 %v24, 16
    %v35 = vpop.permute.xlu0 %34
    %36 = vrot.lane.b32.xlu0 %v27, 16
    %v37 = vpop.permute.xlu0 %36
    %38 = vrot.lane.b32.xlu0 %v30, 16
    %v39 = vpop.permute.xlu0 %38
    %40 = vrot.lane.b32.xlu0 %v33, 16
    %v41 = vpop.permute.xlu0 %40
    %v42 = vsel %vm21, %v35, %v12
    %v43 = vsel %vm21, %v37, %v13
    %v44 = vsel %vm21, %v39, %v14
    %v45 = vsel %vm21, %v41, %v15
    %50 = vrot.lane.b32.xlu0 %v12, 15
    %v51 = vpop.permute.xlu0 %50
    %52 = vrot.lane.b32.xlu0 %v13, 15
    %v53 = vpop.permute.xlu0 %52
    %54 = vrot.lane.b32.xlu0 %v14, 15
    %v55 = vpop.permute.xlu0 %54
    %56 = vrot.lane.b32.xlu0 %v15, 15
    %v57 = vpop.permute.xlu0 %56
    %v62 = vsub.f32 %v42, %v51
    %v63 = vsub.f32 %v43, %v53
    %v64 = vsub.f32 %v44, %v55
    %v65 = vsub.f32 %v45, %v57
    %v66 = vand.u32 2147483647, %v62
    %v67 = vand.u32 2147483647, %v63
    %v68 = vand.u32 2147483647, %v64
    %v69 = vand.u32 2147483647, %v65
    %70 = vrot.lane.b32.xlu0 %v12, 1
    %v71 = vpop.permute.xlu0 %70
    %72 = vrot.lane.b32.xlu0 %v13, 1
    %v73 = vpop.permute.xlu0 %72
    %74 = vrot.lane.b32.xlu0 %v14, 1
    %v75 = vpop.permute.xlu0 %74
    %76 = vrot.lane.b32.xlu0 %v15, 1
    %v77 = vpop.permute.xlu0 %76
    %v82 = vsub.f32 %v42, %v71
    %v83 = vsub.f32 %v43, %v73
    %v84 = vsub.f32 %v44, %v75
    %v85 = vsub.f32 %v45, %v77
    %v86 = vand.u32 2147483647, %v82
    %v87 = vand.u32 2147483647, %v83
    %v88 = vand.u32 2147483647, %v84
    %v89 = vand.u32 2147483647, %v85
    %94 = vrot.lane.b32.xlu0 %v86, 14
    %v95 = vpop.permute.xlu0 %94
    %96 = vrot.lane.b32.xlu0 %v87, 14
    %v97 = vpop.permute.xlu0 %96
    %98 = vrot.lane.b32.xlu0 %v88, 14
    %v99 = vpop.permute.xlu0 %98
    %100 = vrot.lane.b32.xlu0 %v89, 14
    %v101 = vpop.permute.xlu0 %100
    %v106 = vsub.f32 %v66, %v95
    %v107 = vsub.f32 %v67, %v97
    %v108 = vsub.f32 %v68, %v99
    %v109 = vsub.f32 %v69, %v101
    %v110 = vand.u32 2147483647, %v106
    %v111 = vand.u32 2147483647, %v107
    %v112 = vand.u32 2147483647, %v108
    %v113 = vand.u32 2147483647, %v109
    %v114 = vrot.slane %v17, 7
    %v115 = vrot.slane %v18, 7
    %v116 = vrot.slane %v19, 7
    %v117 = vrot.slane %v20, 7
    %v118 = vlaneseq
    %v119 = vshrl.u32 %v118, 7
    %vm120 = vcmp.lt.s32.totalorder %v119, 1
    %v121 = vsel %vm120, %v116, %v117
    %v122 = vsel %vm120, %v115, %v116
    %v123 = vsel %vm120, %v114, %v115
    %v124 = vsel %vm120, %v117, %v114
    %v125 = vrot.slane %v17, 1
    %v126 = vrot.slane %v18, 1
    %v127 = vrot.slane %v19, 1
    %v128 = vrot.slane %v20, 1
    %vm129 = vcmp.lt.s32.totalorder %v119, 7
    %v130 = vsel %vm129, %v127, %v128
    %v131 = vsel %vm129, %v126, %v127
    %v132 = vsel %vm129, %v125, %v126
    %v133 = vsel %vm129, %v128, %v125
    %v134 = vsub.f32 %v124, %v17
    %v135 = vsub.f32 %v123, %v18
    %v136 = vsub.f32 %v122, %v19
    %v137 = vsub.f32 %v121, %v20
    %v138 = vand.u32 2147483647, %v134
    %v139 = vand.u32 2147483647, %v135
    %v140 = vand.u32 2147483647, %v136
    %v141 = vand.u32 2147483647, %v137
    %v142 = vsub.f32 %v132, %v17
    %v143 = vsub.f32 %v131, %v18
    %v144 = vsub.f32 %v130, %v19
    %v145 = vsub.f32 %v133, %v20
    %v146 = vand.u32 2147483647, %v142
    %v147 = vand.u32 2147483647, %v143
    %v148 = vand.u32 2147483647, %v144
    %v149 = vand.u32 2147483647, %v145
    %v150 = vsub.f32 %v138, %v146
    %v151 = vsub.f32 %v139, %v147
    %v152 = vsub.f32 %v140, %v148
    %v153 = vsub.f32 %v141, %v149
    %v154 = vand.u32 2147483647, %v150
    %v155 = vand.u32 2147483647, %v151
    %v156 = vand.u32 2147483647, %v152
    %v157 = vand.u32 2147483647, %v153
    %162 = vrot.lane.b32.xlu0 %v154, 15
    %v163 = vpop.permute.xlu0 %162
    %164 = vrot.lane.b32.xlu0 %v155, 15
    %v165 = vpop.permute.xlu0 %164
    %166 = vrot.lane.b32.xlu0 %v156, 15
    %v167 = vpop.permute.xlu0 %166
    %168 = vrot.lane.b32.xlu0 %v157, 15
    %v169 = vpop.permute.xlu0 %168
    %v174 = vadd.f32 %v110, %v163
    %v175 = vadd.f32 %v111, %v165
    %v176 = vadd.f32 %v112, %v167
    %v177 = vadd.f32 %v113, %v169
    %v178 = vld [vmem:[%s1] sm:$0xff]
    %v179 = vld [vmem:[%s1 + $0x8] sm:$0xff]
    %v180 = vld [vmem:[%s1 + $0x10] sm:$0xff]
    %v181 = vld [vmem:[%s1 + $0x18] sm:$0xff]
    %186 = vrot.lane.b32.xlu0 %v178, 15
    %v187 = vpop.permute.xlu0 %186
    %188 = vrot.lane.b32.xlu0 %v179, 15
    %v189 = vpop.permute.xlu0 %188
    %190 = vrot.lane.b32.xlu0 %v180, 15
    %v191 = vpop.permute.xlu0 %190
    %192 = vrot.lane.b32.xlu0 %v181, 15
    %v193 = vpop.permute.xlu0 %192
    %v198 = vmul.f32 %v174, %v187
    %v199 = vmul.f32 %v175, %v189
    %v200 = vmul.f32 %v176, %v191
    %v201 = vmul.f32 %v177, %v193
    %206 = vrot.lane.b32.xlu0 %v198, 113
    %v207 = vpop.permute.xlu0 %206
    %208 = vrot.lane.b32.xlu0 %v199, 113
    %v209 = vpop.permute.xlu0 %208
    %210 = vrot.lane.b32.xlu0 %v200, 113
    %v211 = vpop.permute.xlu0 %210
    %212 = vrot.lane.b32.xlu0 %v201, 113
    %v213 = vpop.permute.xlu0 %212
    %vm218 = vcmask 130048
    %v219 = vsel %vm218, %v207, 0.0
    %v220 = vsel %vm218, %v209, 0.0
    %v221 = vadd.f32 %v219, %v220
    %v222 = vsel %vm218, %v211, 0.0
    %v223 = vadd.f32 %v221, %v222
    %v224 = vsel %vm218, %v213, 0.0
    %v225 = vadd.f32 %v223, %v224
    %226 = vadd.xlane.f32.xlu0 %v225
    %v227 = vpop.xlane.xlu0 %226
    %v228 = vrot.slane %v227, 4
    %v229 = vadd.f32 %v227, %v228
    %v230 = vrot.slane %v229, 2
    %v231 = vadd.f32 %v229, %v230
    %v232 = vrot.slane %v231, 1
    %v233 = vadd.f32 %v231, %v232
    %s234 = vtos %v233
    %v235 = vstv %s234
    %vm236 = vcmask 0
    %237 = vst.msk [vmem:[#allocation2] sm:$0x1] %vm236, %v235
    // Predicated region
    $region10: #{gic_loss.1} parent=1 // pred_check
      _
    $region11: #{gic_loss.1} parent=1 // pred_check_branch
      %239 = sbr.rel (0) target = $region13
    $region12: #{gic_loss.1} parent=1 // pred_region
      %s241 = ssub.s32 16, 16
      %242 = vsyncadd [#allocation3], %s241
      %s244 = sshll.u32 [#allocation2], 4
      %s245 = int_to_ptr.vmem [resolvable:$true] %s244
      %247 = dma.vmem_to_hbm [thread:$0]  %s245, 16, %s2, [#allocation3]
    $region13: #{gic_loss.1} parent=1 // pred_fallthru
      _
    // Predicated region
    $region14: #{gic_loss.1} parent=1 // pred_check
      _
    $region15: #{gic_loss.1} parent=1 // pred_check_branch
      %249 = sbr.rel (0) target = $region17
    $region16: #{gic_loss.1} parent=1 // pred_region
      %250 = dma.done [#allocation3], 16
    $region17: #{gic_loss.1} parent=1 // pred_fallthru
      _
    %251 = vsyncpa [#allocation3], 1

</llo_original>
